<compile_context>
chip_gen: v7x
topology: tpu7x:2x2x1
jax: 0.10.0
libtpu: 0.0.40
codegen_flags: <defaults>
</compile_context>

<pallas_src>
import functools

import jax
import jax.numpy as jnp
from jax.experimental import pallas as pl
from jax.experimental.pallas import tpu as pltpu


def _round_up(x, m):
    return ((x + m - 1) // m) * m


# ---------------------------------------------------------------------------
# Fused encoder kernel (small graphs): one invocation, h never leaves VMEM.
#   out = A @ ( relu(A @ XW1 + b1) @ W2 ) + b2
# ---------------------------------------------------------------------------
def gcn_fused_kernel(a_ref, xw1_ref, b1_ref, w2_ref, b2_ref, out_ref):
    a = a_ref[...]                                                    # (N,N) bf16
    h = jnp.dot(a, xw1_ref[...], preferred_element_type=jnp.float32) + b1_ref[...]
    h = jnp.maximum(h, 0.0).astype(jnp.bfloat16)                      # layer-1 act
    hw2 = jnp.dot(h, w2_ref[...], preferred_element_type=jnp.float32)
    out = jnp.dot(a, hw2.astype(jnp.bfloat16),
                  preferred_element_type=jnp.float32) + b2_ref[...]
    out_ref[...] = out.astype(out_ref.dtype)


def gcn_fused_pallas(a, xw1, b1, w2, b2, *, out_dtype):
    n_pad = a.shape[0]
    h_pad = xw1.shape[1]
    c_pad = w2.shape[1]
    return pl.pallas_call(
        gcn_fused_kernel,
        out_shape=jax.ShapeDtypeStruct((n_pad, c_pad), out_dtype),
        grid_spec=pltpu.PrefetchScalarGridSpec(
            num_scalar_prefetch=0,
            grid=(1,),
            in_specs=[
                pl.BlockSpec((n_pad, n_pad), lambda i: (0, 0)),   # A_hat
                pl.BlockSpec((n_pad, h_pad), lambda i: (0, 0)),   # X @ W1 (precomputed)
                pl.BlockSpec((1, h_pad), lambda i: (0, 0)),       # b1
                pl.BlockSpec((h_pad, c_pad), lambda i: (0, 0)),   # W2
                pl.BlockSpec((1, c_pad), lambda i: (0, 0)),       # b2
            ],
            out_specs=pl.BlockSpec((n_pad, c_pad), lambda i: (0, 0)),
        ),
        compiler_params=pltpu.CompilerParams(
            dimension_semantics=("arbitrary",),
        ),
    )(a, xw1, b1, w2, b2)


# ---------------------------------------------------------------------------
# Row-tiled aggregation kernel (larger graphs):
#   out_rows = act( A_rows @ M + b )      with M = X@W1 (layer 1) or H@W2 (layer 2)
# ---------------------------------------------------------------------------
def gcn_agg_kernel(a_ref, m_ref, b_ref, out_ref, *, apply_relu):
    acc = jnp.dot(a_ref[...], m_ref[...], preferred_element_type=jnp.float32)
    acc = acc + b_ref[...]
    if apply_relu:
        acc = jnp.maximum(acc, 0.0)
    out_ref[...] = acc.astype(out_ref.dtype)


def gcn_aggregate_pallas(a, m, b, *, apply_relu, out_dtype, tile_m):
    n_pad, k_pad = a.shape
    h_pad = m.shape[1]
    assert n_pad % tile_m == 0 and k_pad % 128 == 0 and h_pad % 128 == 0

    def launch(resident_buffers):
        def resident_spec(shape, index_map):
            if resident_buffers is None:
                return pl.BlockSpec(shape, index_map)
            # Constant-index operands never get re-DMA'd; single-buffer them
            # to halve their VMEM footprint (frees room for larger tile_m).
            return pl.BlockSpec(shape, index_map,
                                pipeline_mode=pl.Buffered(resident_buffers))

        return pl.pallas_call(
            functools.partial(gcn_agg_kernel, apply_relu=apply_relu),
            out_shape=jax.ShapeDtypeStruct((n_pad, h_pad), out_dtype),
            grid_spec=pltpu.PrefetchScalarGridSpec(
                num_scalar_prefetch=0,
                grid=(n_pad // tile_m,),
                in_specs=[
                    pl.BlockSpec((tile_m, k_pad), lambda i: (i, 0)),  # streamed A rows
                    resident_spec((k_pad, h_pad), lambda i: (0, 0)),  # resident M
                    resident_spec((1, h_pad), lambda i: (0, 0)),      # resident bias
                ],
                out_specs=pl.BlockSpec((tile_m, h_pad), lambda i: (i, 0)),
            ),
            compiler_params=pltpu.CompilerParams(
                dimension_semantics=("parallel",),   # row blocks independent
                vmem_limit_bytes=48 * 1024 * 1024,   # < v7x 64 MiB, > default caps
            ),
        )(a, m, b)

    try:
        return launch(1)
    except Exception:
        # Fallback: default double-buffering if single-buffered pipeline_mode
        # is unsupported in this JAX build.
        return launch(None)


# ---------------------------------------------------------------------------
# Dense symmetric-normalized adjacency A_hat = D^{-1/2}(A + I)D^{-1/2}, built
# directly into the padded buffer.  Matches PyG gcn_norm semantics: explicit
# self-loops are replaced by a single weight-1 self-loop per node.
# ---------------------------------------------------------------------------
def build_normalized_adjacency(edge_index, num_nodes, padded_nodes=None):
    if padded_nodes is None:
        padded_nodes = num_nodes
    src = edge_index[0]
    dst = edge_index[1]
    not_self = (src != dst).astype(jnp.float32)
    a = jnp.zeros((padded_nodes, padded_nodes), dtype=jnp.float32)
    a = a.at[dst, src].add(not_self)              # message flows src -> dst
    diag = jnp.arange(num_nodes)
    a = a.at[diag, diag].set(1.0)                 # exactly one self-loop per real node
    deg = jnp.sum(a, axis=1)                      # padded rows/cols stay zero
    d_inv_sqrt = jnp.where(deg > 0.0, 1.0 / jnp.sqrt(jnp.maximum(deg, 1e-12)), 0.0)
    return (d_inv_sqrt[:, None] * a) * d_inv_sqrt[None, :]


# ---------------------------------------------------------------------------
# Encoder wrapper: relu(GCNConv1(x)) -> GCNConv2.
# ---------------------------------------------------------------------------
def gcn_encoder_pallas(x, edge_index, w1, b1, w2, b2, *,
                       tile_m=256, fuse_max_nodes=2048, force_tiled=False):
    n = x.shape[0]
    hidden = w1.shape[1]
    out_ch = w2.shape[1]
    use_fused = (not force_tiled) and (n <= fuse_max_nodes)

    if use_fused:
        n_pad = _round_up(n, 128)
    else:
        assert tile_m % 128 == 0, "tile_m must be a lane multiple"
        n_pad = _round_up(n, tile_m)
    h_pad = _round_up(hidden, 128)
    c_pad = _round_up(out_ch, 128)

    bf = jnp.bfloat16
    a_p = build_normalized_adjacency(edge_index, n, n_pad).astype(bf)

    # Transform-first layer 1: X @ W1 computed exactly once at real width F.
    xw1 = jnp.dot(x, w1)                                           # (n, hidden) f32
    xw1_p = jnp.pad(xw1, ((0, n_pad - n), (0, h_pad - hidden))).astype(bf)
    b1_p = jnp.pad(b1, (0, h_pad - hidden)).reshape(1, h_pad).astype(jnp.float32)
    w2_p = jnp.pad(w2, ((0, h_pad - hidden), (0, c_pad - out_ch))).astype(bf)
    b2_p = jnp.pad(b2, (0, c_pad - out_ch)).reshape(1, c_pad).astype(jnp.float32)

    if use_fused:
        out_p = gcn_fused_pallas(a_p, xw1_p, b1_p, w2_p, b2_p,
                                 out_dtype=jnp.float32)
    else:
        # Layer 1: relu(A @ XW1 + b1), row-tiled.
        h = gcn_aggregate_pallas(a_p, xw1_p, b1_p, apply_relu=True,
                                 out_dtype=bf, tile_m=tile_m)
        # Transform-first layer 2: H @ W2 once (plain XLA), then row-tiled A @ HW2 + b2.
        hw2 = jnp.dot(h, w2_p, preferred_element_type=jnp.float32).astype(bf)
        out_p = gcn_aggregate_pallas(a_p, hw2, b2_p, apply_relu=False,
                                     out_dtype=jnp.float32, tile_m=tile_m)
    return out_p[:n, :out_ch]


# ---------------------------------------------------------------------------
# Deterministic parameter init (GCNConv shapes: W: [in, out], b: [out]).
# PyG initializes biases to zero; small random biases here exercise the path.
# ---------------------------------------------------------------------------
def init_params(key, in_channels, hidden_channels, out_channels):
    k1, k2, k3, k4 = jax.random.split(key, 4)

    def glorot(k, fan_in, fan_out):
        limit = jnp.sqrt(6.0 / (fan_in + fan_out))
        return jax.random.uniform(k, (fan_in, fan_out),
                                  minval=-limit, maxval=limit, dtype=jnp.float32)

    w1 = glorot(k1, in_channels, hidden_channels)
    w2 = glorot(k2, hidden_channels, out_channels)
    b1 = 0.05 * jax.random.normal(k3, (hidden_channels,), dtype=jnp.float32)
    b2 = 0.05 * jax.random.normal(k4, (out_channels,), dtype=jnp.float32)
    return w1, b1, w2, b2


# ---------------------------------------------------------------------------
# Pure-JAX references.
# ---------------------------------------------------------------------------
def gcn_encoder_ref_f32(a_hat, x, w1, b1, w2, b2):
    h = jnp.maximum(a_hat @ (x @ w1) + b1, 0.0)
    return a_hat @ (h @ w2) + b2


def gcn_encoder_ref_bf16(a_hat, x, w1, b1, w2, b2):
    bf = jnp.bfloat16
    a = a_hat.astype(bf)
    xw1 = jnp.dot(x, w1).astype(bf)
    h = jnp.dot(a, xw1, preferred_element_type=jnp.float32) + b1
    h = jnp.maximum(h, 0.0).astype(bf)
    hw2 = jnp.dot(h, w2.astype(bf), preferred_element_type=jnp.float32).astype(bf)
    return jnp.dot(a, hw2, preferred_element_type=jnp.float32) + b2


if __name__ == "__main__":
    key = jax.random.PRNGKey(0)
    k_x, k_e, k_p, k_x2, k_e2 = jax.random.split(key, 5)

    # Spec configuration: GCNEncoder(in_channels=5, hidden_channels=128) -> 64
    num_nodes, num_edges = 16, 32
    in_channels, hidden_channels, out_channels = 5, 128, 64

    x = jax.random.normal(k_x, (num_nodes, in_channels), dtype=jnp.float32)
    edge_index = jax.random.randint(k_e, (2, num_edges), 0, num_nodes,
                                    dtype=jnp.int32)
    w1, b1, w2, b2 = init_params(k_p, in_channels, hidden_channels, out_channels)

    # Fused path (default for small graphs).
    out = gcn_encoder_pallas(x, edge_index, w1, b1, w2, b2)
    out = jax.block_until_ready(out)
    assert out.shape == (num_nodes, out_channels)

    a_hat = build_normalized_adjacency(edge_index, num_nodes)
    ref16 = gcn_encoder_ref_bf16(a_hat, x, w1, b1, w2, b2)
    ref32 = gcn_encoder_ref_f32(a_hat, x, w1, b1, w2, b2)
    assert jnp.allclose(out, ref16, atol=3e-2, rtol=3e-2), "fused: mismatch vs bf16 ref"
    assert jnp.allclose(out, ref32, atol=1e-1, rtol=1e-1), "fused: mismatch vs f32 ref"

    # Slightly larger config exercising the row-tiled multi-block path
    # (tile_m=128 works on all generations; use 256 on v6e/v7x at scale).
    n2, e2 = 320, 1200
    x2 = jax.random.normal(k_x2, (n2, in_channels), dtype=jnp.float32)
    edge_index2 = jax.random.randint(k_e2, (2, e2), 0, n2, dtype=jnp.int32)
    out2 = gcn_encoder_pallas(x2, edge_index2, w1, b1, w2, b2,
                              tile_m=128, force_tiled=True)
    out2 = jax.block_until_ready(out2)
    a_hat2 = build_normalized_adjacency(edge_index2, n2)
    ref2 = gcn_encoder_ref_bf16(a_hat2, x2, w1, b1, w2, b2)
    assert out2.shape == (n2, out_channels)
    assert jnp.allclose(out2, ref2, atol=3e-2, rtol=3e-2), "tiled: mismatch vs bf16 ref"

    print("KERNEL_OK")
</pallas_src>

<mosaic_0001>
module attributes {stable_mosaic.version = 11 : i64} {
  func.func @gcn_fused_kernel(%arg0: i32, %arg1: memref<128x128xbf16, #tpu.memory_space<vmem>>, %arg2: memref<128x128xbf16, #tpu.memory_space<vmem>>, %arg3: memref<1x128xf32, #tpu.memory_space<vmem>>, %arg4: memref<128x128xbf16, #tpu.memory_space<vmem>>, %arg5: memref<1x128xf32, #tpu.memory_space<vmem>>, %arg6: memref<128x128xf32, #tpu.memory_space<vmem>>) attributes {dimension_semantics = [#tpu.dimension_semantics<arbitrary>], iteration_bounds = array<i64: 1>, scalar_prefetch = 0 : i64, scratch_operands = 0 : i64, tpu.core_type = #tpu.core_type<tc>, window_params = [{pipeline_mode = #tpu.pipeline_mode<synchronous>, transform_indices = @transform_0, window_bounds = array<i64: 128, 128>}, {pipeline_mode = #tpu.pipeline_mode<synchronous>, transform_indices = @transform_1, window_bounds = array<i64: 128, 128>}, {pipeline_mode = #tpu.pipeline_mode<synchronous>, transform_indices = @transform_2, window_bounds = array<i64: 1, 128>}, {pipeline_mode = #tpu.pipeline_mode<synchronous>, transform_indices = @transform_3, window_bounds = array<i64: 128, 128>}, {pipeline_mode = #tpu.pipeline_mode<synchronous>, transform_indices = @transform_4, window_bounds = array<i64: 1, 128>}, {pipeline_mode = #tpu.pipeline_mode<synchronous>, transform_indices = @transform_5, window_bounds = array<i64: 128, 128>}]} {
    %c0 = arith.constant 0 : index
    %c0_0 = arith.constant 0 : index
    %0 = vector.load %arg1[%c0, %c0_0] : memref<128x128xbf16, #tpu.memory_space<vmem>>, vector<128x128xbf16>
    %c0_1 = arith.constant 0 : index
    %c0_2 = arith.constant 0 : index
    %1 = vector.load %arg2[%c0_1, %c0_2] : memref<128x128xbf16, #tpu.memory_space<vmem>>, vector<128x128xbf16>
    %cst = arith.constant dense<0.000000e+00> : vector<128x128xf32>
    %2 = tpu.matmul %0, %1, %cst {dimension_numbers = #tpu.dot_dimension_numbers<[1], [0], [0], [1], [0, 0, 1, 1], [], []>} : vector<128x128xbf16>, vector<128x128xbf16>, vector<128x128xf32> -> vector<128x128xf32>
    %c0_3 = arith.constant 0 : index
    %c0_4 = arith.constant 0 : index
    %3 = vector.load %arg3[%c0_3, %c0_4] : memref<1x128xf32, #tpu.memory_space<vmem>>, vector<1x128xf32>
    %4 = vector.broadcast %3 : vector<1x128xf32> to vector<128x128xf32>
    %5 = arith.addf %2, %4 : vector<128x128xf32>
    %cst_5 = arith.constant 0.000000e+00 : f32
    %6 = vector.broadcast %cst_5 : f32 to vector<128x128xf32>
    %7 = arith.maximumf %5, %6 : vector<128x128xf32>
    %8 = arith.truncf %7 : vector<128x128xf32> to vector<128x128xbf16>
    %c0_6 = arith.constant 0 : index
    %c0_7 = arith.constant 0 : index
    %9 = vector.load %arg4[%c0_6, %c0_7] : memref<128x128xbf16, #tpu.memory_space<vmem>>, vector<128x128xbf16>
    %cst_8 = arith.constant dense<0.000000e+00> : vector<128x128xf32>
    %10 = tpu.matmul %8, %9, %cst_8 {dimension_numbers = #tpu.dot_dimension_numbers<[1], [0], [0], [1], [0, 0, 1, 1], [], []>} : vector<128x128xbf16>, vector<128x128xbf16>, vector<128x128xf32> -> vector<128x128xf32>
    %11 = arith.truncf %10 : vector<128x128xf32> to vector<128x128xbf16>
    %cst_9 = arith.constant dense<0.000000e+00> : vector<128x128xf32>
    %12 = tpu.matmul %0, %11, %cst_9 {dimension_numbers = #tpu.dot_dimension_numbers<[1], [0], [0], [1], [0, 0, 1, 1], [], []>} : vector<128x128xbf16>, vector<128x128xbf16>, vector<128x128xf32> -> vector<128x128xf32>
    %c0_10 = arith.constant 0 : index
    %c0_11 = arith.constant 0 : index
    %13 = vector.load %arg5[%c0_10, %c0_11] : memref<1x128xf32, #tpu.memory_space<vmem>>, vector<1x128xf32>
    %14 = vector.broadcast %13 : vector<1x128xf32> to vector<128x128xf32>
    %15 = arith.addf %12, %14 : vector<128x128xf32>
    %c0_12 = arith.constant 0 : index
    %c0_13 = arith.constant 0 : index
    %16 = vector.load %arg6[%c0_12, %c0_13] : memref<128x128xf32, #tpu.memory_space<vmem>>, vector<128x128xf32>
    tpu.vector_store %arg6[%c0_12, %c0_13], %15 {strides = array<i32>} : memref<128x128xf32, #tpu.memory_space<vmem>>, vector<128x128xf32>,
    return
  }
  func.func @transform_0(%arg0: i32) -> (i32, i32) {
    %c0_i32 = arith.constant 0 : i32
    %c0_i32_0 = arith.constant 0 : i32
    %c0_i32_1 = arith.constant 0 : i32
    return %c0_i32, %c0_i32_0 : i32, i32
  }
  func.func @transform_1(%arg0: i32) -> (i32, i32) {
    %c0_i32 = arith.constant 0 : i32
    %c0_i32_0 = arith.constant 0 : i32
    %c0_i32_1 = arith.constant 0 : i32
    return %c0_i32, %c0_i32_0 : i32, i32
  }
  func.func @transform_2(%arg0: i32) -> (i32, i32) {
    %c0_i32 = arith.constant 0 : i32
    %c0_i32_0 = arith.constant 0 : i32
    %c0_i32_1 = arith.constant 0 : i32
    return %c0_i32, %c0_i32_0 : i32, i32
  }
  func.func @transform_3(%arg0: i32) -> (i32, i32) {
    %c0_i32 = arith.constant 0 : i32
    %c0_i32_0 = arith.constant 0 : i32
    %c0_i32_1 = arith.constant 0 : i32
    return %c0_i32, %c0_i32_0 : i32, i32
  }
  func.func @transform_4(%arg0: i32) -> (i32, i32) {
    %c0_i32 = arith.constant 0 : i32
    %c0_i32_0 = arith.constant 0 : i32
    %c0_i32_1 = arith.constant 0 : i32
    return %c0_i32, %c0_i32_0 : i32, i32
  }
  func.func @transform_5(%arg0: i32) -> (i32, i32) {
    %c0_i32 = arith.constant 0 : i32
    %c0_i32_0 = arith.constant 0 : i32
    %c0_i32_1 = arith.constant 0 : i32
    return %c0_i32, %c0_i32_0 : i32, i32
  }
}

</mosaic_0001>

<llo_original>
// kernel: tpu_custom_call.1
$region0: #{tpu_custom_call.1}
  #allocation0 [shape = 'u32[]', space=smem, size = 0x4, offset = 0x4, fixed_abs, tag = 'smem constant byte address 0x4 - core index']
  #allocation1 [shape = 'u32[144,128]{1,0:T(1,128)}', space=vmem, size = 0x12000, scoped, tag = 'internal scratch']
  %s0 = inlined_call_operand.hbm [shape: bf16[128,128], index: 0, kind: input, shape index: {}]
  %s1 = inlined_call_operand.hbm [shape: bf16[128,128], index: 1, kind: input, shape index: {}]
  %s2 = inlined_call_operand.vmem [shape: f32[1,128], index: 2, kind: input, shape index: {}]
  %s3 = inlined_call_operand.hbm [shape: bf16[128,128], index: 3, kind: input, shape index: {}]
  %s4 = inlined_call_operand.vmem [shape: f32[1,128], index: 4, kind: input, shape index: {}]
  %s5 = inlined_call_operand.hbm [shape: f32[128,128], index: 5, kind: output, shape index: {}]
  %s6 = sld [smem:[#allocation0]]
  $region42: #{tpu_custom_call.1} parent=0
    _
  %s8 = ssub.s32 1, %s6
  %s9 = scalar_select 0, %s8, %s6
  $region1: #{tpu_custom_call.1} parent=0
    #allocation2 [shape = 'u8[32768]{0}', space=vmem, size = 0x8000, scoped, tag = 'input window, operand 0, single buffered']
    #allocation3 [shape = 's32[1]{0}', space=sflag, size = 0x4, scoped, tag = 'scoped memory for tpu_custom_call.1']
    #allocation4 [shape = 's32[1]{0}', space=sflag, size = 0x4, scoped, tag = 'scoped memory for tpu_custom_call.1']
    #allocation5 [shape = 'u8[32768]{0}', space=vmem, size = 0x8000, scoped, tag = 'input window, operand 1, single buffered']
    #allocation6 [shape = 's32[1]{0}', space=sflag, size = 0x4, scoped, tag = 'scoped memory for tpu_custom_call.1']
    #allocation7 [shape = 'u8[32768]{0}', space=vmem, size = 0x8000, scoped, tag = 'input window, operand 3, single buffered']
    #allocation8 [shape = 'u8[65536]{0}', space=vmem, size = 0x10000, scoped, tag = 'output window, operand 0, single buffered']
    %10 = vsyncpa [#allocation3], 0
    %11 = vsyncpa [#allocation6], 0
    %12 = vsyncpa [#allocation4], 0
    // Predicated region
    $region2: #{tpu_custom_call.1} parent=1 // pred_check
      _
    $region3: #{tpu_custom_call.1} parent=1 // pred_check_branch
      %14 = sbr.rel (0) target = $region5
    $region4: #{tpu_custom_call.1} parent=1 // pred_region
      %s16 = ssub.s32 1024, 1024
      %17 = vsyncadd [#allocation3], %s16
      %s18 = sshll.u32 [#allocation2], 4
      %s19 = int_to_ptr.vmem [resolvable:$true] %s18
      %24 = dma.hbm_to_vmem [thread:$0]  %s0, 1024, %s19, [#allocation3], 64, 64, 4
    $region5: #{tpu_custom_call.1} parent=1 // pred_fallthru
      _
    // Predicated region
    $region6: #{tpu_custom_call.1} parent=1 // pred_check
      _
    $region7: #{tpu_custom_call.1} parent=1 // pred_check_branch
      %26 = sbr.rel (0) target = $region9
    $region8: #{tpu_custom_call.1} parent=1 // pred_region
      %s28 = ssub.s32 1024, 1024
      %29 = vsyncadd [#allocation6], %s28
      %s30 = sshll.u32 [#allocation5], 4
      %s31 = int_to_ptr.vmem [resolvable:$true] %s30
      %36 = dma.hbm_to_vmem [thread:$0]  %s1, 1024, %s31, [#allocation6], 64, 64, 4
    $region9: #{tpu_custom_call.1} parent=1 // pred_fallthru
      _
    // Predicated region
    $region10: #{tpu_custom_call.1} parent=1 // pred_check
      _
    $region11: #{tpu_custom_call.1} parent=1 // pred_check_branch
      %38 = sbr.rel (0) target = $region13
    $region12: #{tpu_custom_call.1} parent=1 // pred_region
      _
    $region13: #{tpu_custom_call.1} parent=1 // pred_fallthru
      _
    // Predicated region
    $region14: #{tpu_custom_call.1} parent=1 // pred_check
      _
    $region15: #{tpu_custom_call.1} parent=1 // pred_check_branch
      %40 = sbr.rel (0) target = $region17
    $region16: #{tpu_custom_call.1} parent=1 // pred_region
      %s42 = ssub.s32 1024, 1024
      %43 = vsyncadd [#allocation6], %s42
      %s44 = sshll.u32 [#allocation7], 4
      %s45 = int_to_ptr.vmem [resolvable:$true] %s44
      %50 = dma.hbm_to_vmem [thread:$0]  %s3, 1024, %s45, [#allocation6], 64, 64, 4
    $region17: #{tpu_custom_call.1} parent=1 // pred_fallthru
      _
    // Predicated region
    $region18: #{tpu_custom_call.1} parent=1 // pred_check
      _
    $region19: #{tpu_custom_call.1} parent=1 // pred_check_branch
      %52 = sbr.rel (0) target = $region21
    $region20: #{tpu_custom_call.1} parent=1 // pred_region
      _
    $region21: #{tpu_custom_call.1} parent=1 // pred_fallthru
      _
    // Predicated region
    $region22: #{tpu_custom_call.1} parent=1 // pred_check
      _
    $region23: #{tpu_custom_call.1} parent=1 // pred_check_branch
      %54 = sbr.rel (0) target = $region25
    $region24: #{tpu_custom_call.1} parent=1 // pred_region
      %55 = dma.done [#allocation3], 1024
    $region25: #{tpu_custom_call.1} parent=1 // pred_fallthru
      _
    // Predicated region
    $region26: #{tpu_custom_call.1} parent=1 // pred_check
      _
    $region27: #{tpu_custom_call.1} parent=1 // pred_check_branch
      %57 = sbr.rel (0) target = $region29
    $region28: #{tpu_custom_call.1} parent=1 // pred_region
      %58 = dma.done [#allocation6], 1024
    $region29: #{tpu_custom_call.1} parent=1 // pred_fallthru
      _
    // Predicated region
    $region30: #{tpu_custom_call.1} parent=1 // pred_check
      _
    $region31: #{tpu_custom_call.1} parent=1 // pred_check_branch
      %60 = sbr.rel (0) target = $region33
    $region32: #{tpu_custom_call.1} parent=1 // pred_region
      %61 = dma.done [#allocation6], 1024
    $region33: #{tpu_custom_call.1} parent=1 // pred_fallthru
      _
    %v63 = vld [vmem:[#allocation2] sm:$0xf]
    %v64 = vld [vmem:[#allocation2 + $0x4] sm:$0xf]
    %v65 = vld [vmem:[#allocation2 + $0x8] sm:$0xf]
    %v66 = vld [vmem:[#allocation2 + $0xc] sm:$0xf]
    %v67 = vld [vmem:[#allocation2 + $0x10] sm:$0xf]
    %v68 = vld [vmem:[#allocation2 + $0x14] sm:$0xf]
    %v69 = vld [vmem:[#allocation2 + $0x18] sm:$0xf]
    %v70 = vld [vmem:[#allocation2 + $0x1c] sm:$0xf]
    %v71 = vld [vmem:[#allocation2 + $0x20] sm:$0xf]
    %v72 = vld [vmem:[#allocation2 + $0x24] sm:$0xf]
    %v73 = vld [vmem:[#allocation2 + $0x28] sm:$0xf]
    %v74 = vld [vmem:[#allocation2 + $0x2c] sm:$0xf]
    %v75 = vld [vmem:[#allocation2 + $0x30] sm:$0xf]
    %v76 = vld [vmem:[#allocation2 + $0x34] sm:$0xf]
    %v77 = vld [vmem:[#allocation2 + $0x38] sm:$0xf]
    %v78 = vld [vmem:[#allocation2 + $0x3c] sm:$0xf]
    %v79 = vld [vmem:[#allocation5] sm:$0xf]
    %v80 = vld [vmem:[#allocation5 + $0x4] sm:$0xf]
    %v81 = vld [vmem:[#allocation5 + $0x8] sm:$0xf]
    %v82 = vld [vmem:[#allocation5 + $0xc] sm:$0xf]
    %v83 = vld [vmem:[#allocation5 + $0x10] sm:$0xf]
    %v84 = vld [vmem:[#allocation5 + $0x14] sm:$0xf]
    %v85 = vld [vmem:[#allocation5 + $0x18] sm:$0xf]
    %v86 = vld [vmem:[#allocation5 + $0x1c] sm:$0xf]
    %v87 = vld [vmem:[#allocation5 + $0x20] sm:$0xf]
    %v88 = vld [vmem:[#allocation5 + $0x24] sm:$0xf]
    %v89 = vld [vmem:[#allocation5 + $0x28] sm:$0xf]
    %v90 = vld [vmem:[#allocation5 + $0x2c] sm:$0xf]
    %v91 = vld [vmem:[#allocation5 + $0x30] sm:$0xf]
    %v92 = vld [vmem:[#allocation5 + $0x34] sm:$0xf]
    %v93 = vld [vmem:[#allocation5 + $0x38] sm:$0xf]
    %v94 = vld [vmem:[#allocation5 + $0x3c] sm:$0xf]
    %v95 = vld [vmem:[%s2] sm:$0x1]
    %v97 = vlaneseq
    %v98 = vshrl.u32 %v97, 7
    %v99 = vsub.s32 0, %v98
    %v100 = vrot.slane %v95, %v99
    %v118 = vunpack.c.l.b16 %v63
    %v119 = vunpack.c.l.b16 %v64
    %v120 = vunpack.c.l.b16 %v65
    %v121 = vunpack.c.l.b16 %v66
    %v122 = vunpack.c.l.b16 %v67
    %v123 = vunpack.c.l.b16 %v68
    %v124 = vunpack.c.l.b16 %v69
    %v125 = vunpack.c.l.b16 %v70
    %v126 = vunpack.c.l.b16 %v71
    %v127 = vunpack.c.l.b16 %v72
    %v128 = vunpack.c.l.b16 %v73
    %v129 = vunpack.c.l.b16 %v74
    %v130 = vunpack.c.l.b16 %v75
    %v131 = vunpack.c.l.b16 %v76
    %v132 = vunpack.c.l.b16 %v77
    %v133 = vunpack.c.l.b16 %v78
    %v134 = vpack.c.b16 %v119, %v118
    %v135 = vpack.c.b16 %v121, %v120
    %v136 = vpack.c.b16 %v123, %v122
    %v137 = vpack.c.b16 %v125, %v124
    %v138 = vpack.c.b16 %v127, %v126
    %v139 = vpack.c.b16 %v129, %v128
    %v140 = vpack.c.b16 %v131, %v130
    %v141 = vpack.c.b16 %v133, %v132
    %v166 = vunpack.c.l.b16 %v79
    %v167 = vunpack.c.l.b16 %v80
    %v168 = vunpack.c.l.b16 %v81
    %v169 = vunpack.c.l.b16 %v82
    %v170 = vunpack.c.l.b16 %v83
    %v171 = vunpack.c.l.b16 %v84
    %v172 = vunpack.c.l.b16 %v85
    %v173 = vunpack.c.l.b16 %v86
    %v174 = vunpack.c.l.b16 %v87
    %v175 = vunpack.c.l.b16 %v88
    %v176 = vunpack.c.l.b16 %v89
    %v177 = vunpack.c.l.b16 %v90
    %v178 = vunpack.c.l.b16 %v91
    %v179 = vunpack.c.l.b16 %v92
    %v180 = vunpack.c.l.b16 %v93
    %v181 = vunpack.c.l.b16 %v94
    %v182 = vpack.c.b16 %v167, %v166
    %v183 = vpack.c.b16 %v169, %v168
    %v184 = vpack.c.b16 %v171, %v170
    %v185 = vpack.c.b16 %v173, %v172
    %v186 = vpack.c.b16 %v175, %v174
    %v187 = vpack.c.b16 %v177, %v176
    %v188 = vpack.c.b16 %v179, %v178
    %v189 = vpack.c.b16 %v181, %v180
    %198 = vmatprep.subr.bf16.mxu0 0
    %199 = vmatpush1.bf16.msra.mxu0 %v182
    %200 = vmatprep.subr.bf16.mxu0 0
    %201 = vmatpush1.bf16.msra.mxu0 %v183
    %202 = vmatprep.subr.bf16.mxu0 0
    %203 = vmatpush1.bf16.msra.mxu0 %v184
    %204 = vmatprep.subr.bf16.mxu0 0
    %205 = vmatpush1.bf16.msra.mxu0 %v185
    %206 = vmatprep.subr.bf16.mxu0 0
    %207 = vmatpush1.bf16.msra.mxu0 %v186
    %208 = vmatprep.subr.bf16.mxu0 0
    %209 = vmatpush1.bf16.msra.mxu0 %v187
    %210 = vmatprep.subr.bf16.mxu0 0
    %211 = vmatpush1.bf16.msra.mxu0 %v188
    %212 = vmatprep.subr.bf16.mxu0 0
    %213 = vmatpush1.bf16.msra.mxu0 %v189
    %214 = vmatprep.subr.bf16.mxu0 0
    %215 = vmatpush1.bf16.msra.mxu0 0
    %216 = vmatprep.subr.bf16.mxu0 0
    %217 = vmatpush1.bf16.msra.mxu0 0
    %218 = vmatprep.subr.bf16.mxu0 0
    %219 = vmatpush1.bf16.msra.mxu0 0
    %220 = vmatprep.subr.bf16.mxu0 0
    %221 = vmatpush1.bf16.msra.mxu0 0
    %222 = vmatprep.subr.bf16.mxu0 0
    %223 = vmatpush1.bf16.msra.mxu0 0
    %224 = vmatprep.subr.bf16.mxu0 0
    %225 = vmatpush1.bf16.msra.mxu0 0
    %226 = vmatprep.subr.bf16.mxu0 0
    %227 = vmatpush1.bf16.msra.mxu0 0
    %228 = vmatprep.subr.bf16.mxu0 0
    %229 = vmatpush1.bf16.msra.mxu0 0
    %230 = vmatprep.mubr.bf16.mxu0 0
    %231 = vmatmul.mubr.bf16.gmra.mrb[0].mxu0 %v134
    %v232 = vpop.f32.mrb[0].mxu0
    %v233 = vadd.f32 %v100, %v232
    %v234 = vpop.f32.mrb[0].mxu0
    %v235 = vpop.f32.mrb[0].mxu0
    %v236 = vadd.f32 %v100, %v235
    %v237 = vpop.f32.mrb[0].mxu0
    %238 = vmatprep.mubr.bf16.mxu0 0
    %239 = vmatmul.mubr.bf16.gmra.mrb[0].mxu0 %v135
    %v240 = vpop.f32.mrb[0].mxu0
    %v241 = vadd.f32 %v100, %v240
    %v242 = vpop.f32.mrb[0].mxu0
    %v243 = vpop.f32.mrb[0].mxu0
    %v244 = vadd.f32 %v100, %v243
    %v245 = vpop.f32.mrb[0].mxu0
    %246 = vmatprep.mubr.bf16.mxu0 0
    %247 = vmatmul.mubr.bf16.gmra.mrb[0].mxu0 %v136
    %v248 = vpop.f32.mrb[0].mxu0
    %v249 = vadd.f32 %v100, %v248
    %v250 = vpop.f32.mrb[0].mxu0
    %v251 = vpop.f32.mrb[0].mxu0
    %v252 = vadd.f32 %v100, %v251
    %v253 = vpop.f32.mrb[0].mxu0
    %254 = vmatprep.mubr.bf16.mxu0 0
    %255 = vmatmul.mubr.bf16.gmra.mrb[0].mxu0 %v137
    %v256 = vpop.f32.mrb[0].mxu0
    %v257 = vadd.f32 %v100, %v256
    %v258 = vpop.f32.mrb[0].mxu0
    %v259 = vpop.f32.mrb[0].mxu0
    %v260 = vadd.f32 %v100, %v259
    %v261 = vpop.f32.mrb[0].mxu0
    %262 = vmatprep.mubr.bf16.mxu0 0
    %263 = vmatmul.mubr.bf16.gmra.mrb[0].mxu0 %v138
    %v264 = vpop.f32.mrb[0].mxu0
    %v265 = vadd.f32 %v100, %v264
    %v266 = vpop.f32.mrb[0].mxu0
    %v267 = vpop.f32.mrb[0].mxu0
    %v268 = vadd.f32 %v100, %v267
    %v269 = vpop.f32.mrb[0].mxu0
    %270 = vmatprep.mubr.bf16.mxu0 0
    %271 = vmatmul.mubr.bf16.gmra.mrb[0].mxu0 %v139
    %v272 = vpop.f32.mrb[0].mxu0
    %v273 = vadd.f32 %v100, %v272
    %v274 = vpop.f32.mrb[0].mxu0
    %v275 = vpop.f32.mrb[0].mxu0
    %v276 = vadd.f32 %v100, %v275
    %v277 = vpop.f32.mrb[0].mxu0
    %278 = vmatprep.mubr.bf16.mxu0 0
    %279 = vmatmul.mubr.bf16.gmra.mrb[0].mxu0 %v140
    %v280 = vpop.f32.mrb[0].mxu0
    %v281 = vadd.f32 %v100, %v280
    %v282 = vpop.f32.mrb[0].mxu0
    %v283 = vpop.f32.mrb[0].mxu0
    %v284 = vadd.f32 %v100, %v283
    %v285 = vpop.f32.mrb[0].mxu0
    %286 = vmatprep.mubr.bf16.mxu0 0
    %287 = vmatmul.mubr.bf16.gmra.mrb[0].mxu0 %v141
    %v288 = vpop.f32.mrb[0].mxu0
    %v289 = vadd.f32 %v100, %v288
    %v290 = vpop.f32.mrb[0].mxu0
    %v291 = vpop.f32.mrb[0].mxu0
    %v292 = vadd.f32 %v100, %v291
    %v293 = vpop.f32.mrb[0].mxu0
    %294 = vdwg.mxu0
    %v295 = vmax.f32 %v233, 0.0
    %v296 = vmax.f32 %v236, 0.0
    %v297 = vmax.f32 %v241, 0.0
    %v298 = vmax.f32 %v244, 0.0
    %v299 = vmax.f32 %v249, 0.0
    %v300 = vmax.f32 %v252, 0.0
    %v301 = vmax.f32 %v257, 0.0
    %v302 = vmax.f32 %v260, 0.0
    %v303 = vmax.f32 %v265, 0.0
    %v304 = vmax.f32 %v268, 0.0
    %v305 = vmax.f32 %v273, 0.0
    %v306 = vmax.f32 %v276, 0.0
    %v307 = vmax.f32 %v281, 0.0
    %v308 = vmax.f32 %v284, 0.0
    %v309 = vmax.f32 %v289, 0.0
    %v310 = vmax.f32 %v292, 0.0
    %v311 = vpack.c.bf16 %v296, %v295
    %v312 = vpack.c.bf16 %v298, %v297
    %v313 = vpack.c.bf16 %v300, %v299
    %v314 = vpack.c.bf16 %v302, %v301
    %v315 = vpack.c.bf16 %v304, %v303
    %v316 = vpack.c.bf16 %v306, %v305
    %v317 = vpack.c.bf16 %v308, %v307
    %v318 = vpack.c.bf16 %v310, %v309
    %v319 = vld [vmem:[#allocation7] sm:$0xf]
    %v320 = vld [vmem:[#allocation7 + $0x4] sm:$0xf]
    %v321 = vld [vmem:[#allocation7 + $0x8] sm:$0xf]
    %v322 = vld [vmem:[#allocation7 + $0xc] sm:$0xf]
    %v323 = vld [vmem:[#allocation7 + $0x10] sm:$0xf]
    %v324 = vld [vmem:[#allocation7 + $0x14] sm:$0xf]
    %v325 = vld [vmem:[#allocation7 + $0x18] sm:$0xf]
    %v326 = vld [vmem:[#allocation7 + $0x1c] sm:$0xf]
    %v327 = vld [vmem:[#allocation7 + $0x20] sm:$0xf]
    %v328 = vld [vmem:[#allocation7 + $0x24] sm:$0xf]
    %v329 = vld [vmem:[#allocation7 + $0x28] sm:$0xf]
    %v330 = vld [vmem:[#allocation7 + $0x2c] sm:$0xf]
    %v331 = vld [vmem:[#allocation7 + $0x30] sm:$0xf]
    %v332 = vld [vmem:[#allocation7 + $0x34] sm:$0xf]
    %v333 = vld [vmem:[#allocation7 + $0x38] sm:$0xf]
    %v334 = vld [vmem:[#allocation7 + $0x3c] sm:$0xf]
    %v351 = vunpack.c.l.b16 %v319
    %v352 = vunpack.c.l.b16 %v320
    %v353 = vunpack.c.l.b16 %v321
    %v354 = vunpack.c.l.b16 %v322
    %v355 = vunpack.c.l.b16 %v323
    %v356 = vunpack.c.l.b16 %v324
    %v357 = vunpack.c.l.b16 %v325
    %v358 = vunpack.c.l.b16 %v326
    %v359 = vunpack.c.l.b16 %v327
    %v360 = vunpack.c.l.b16 %v328
    %v361 = vunpack.c.l.b16 %v329
    %v362 = vunpack.c.l.b16 %v330
    %v363 = vunpack.c.l.b16 %v331
    %v364 = vunpack.c.l.b16 %v332
    %v365 = vunpack.c.l.b16 %v333
    %v366 = vunpack.c.l.b16 %v334
    %v367 = vpack.c.b16 %v352, %v351
    %v368 = vpack.c.b16 %v354, %v353
    %v369 = vpack.c.b16 %v356, %v355
    %v370 = vpack.c.b16 %v358, %v357
    %v371 = vpack.c.b16 %v360, %v359
    %v372 = vpack.c.b16 %v362, %v361
    %v373 = vpack.c.b16 %v364, %v363
    %v374 = vpack.c.b16 %v366, %v365
    %383 = vmatprep.subr.bf16.mxu0 0
    %384 = vmatpush1.bf16.msra.mxu0 %v367
    %385 = vmatprep.subr.bf16.mxu0 0
    %386 = vmatpush1.bf16.msra.mxu0 %v368
    %387 = vmatprep.subr.bf16.mxu0 0
    %388 = vmatpush1.bf16.msra.mxu0 %v369
    %389 = vmatprep.subr.bf16.mxu0 0
    %390 = vmatpush1.bf16.msra.mxu0 %v370
    %391 = vmatprep.subr.bf16.mxu0 0
    %392 = vmatpush1.bf16.msra.mxu0 %v371
    %393 = vmatprep.subr.bf16.mxu0 0
    %394 = vmatpush1.bf16.msra.mxu0 %v372
    %395 = vmatprep.subr.bf16.mxu0 0
    %396 = vmatpush1.bf16.msra.mxu0 %v373
    %397 = vmatprep.subr.bf16.mxu0 0
    %398 = vmatpush1.bf16.msra.mxu0 %v374
    %399 = vmatprep.subr.bf16.mxu0 0
    %400 = vmatpush1.bf16.msra.mxu0 0
    %401 = vmatprep.subr.bf16.mxu0 0
    %402 = vmatpush1.bf16.msra.mxu0 0
    %403 = vmatprep.subr.bf16.mxu0 0
    %404 = vmatpush1.bf16.msra.mxu0 0
    %405 = vmatprep.subr.bf16.mxu0 0
    %406 = vmatpush1.bf16.msra.mxu0 0
    %407 = vmatprep.subr.bf16.mxu0 0
    %408 = vmatpush1.bf16.msra.mxu0 0
    %409 = vmatprep.subr.bf16.mxu0 0
    %410 = vmatpush1.bf16.msra.mxu0 0
    %411 = vmatprep.subr.bf16.mxu0 0
    %412 = vmatpush1.bf16.msra.mxu0 0
    %413 = vmatprep.subr.bf16.mxu0 0
    %414 = vmatpush1.bf16.msra.mxu0 0
    %415 = vmatprep.mubr.bf16.mxu0 0
    %416 = vmatmul.mubr.bf16.gmra.mrb[0].mxu0 %v311
    %v417 = vpop.f32.mrb[0].mxu0
    %v418 = vadd.f32 0.0, %v417
    %v419 = vpop.f32.mrb[0].mxu0
    %v420 = vpop.f32.mrb[0].mxu0
    %v421 = vadd.f32 0.0, %v420
    %v422 = vpop.f32.mrb[0].mxu0
    %423 = vmatprep.mubr.bf16.mxu0 0
    %424 = vmatmul.mubr.bf16.gmra.mrb[0].mxu0 %v312
    %v425 = vpop.f32.mrb[0].mxu0
    %v426 = vadd.f32 0.0, %v425
    %v427 = vpop.f32.mrb[0].mxu0
    %v428 = vpop.f32.mrb[0].mxu0
    %v429 = vadd.f32 0.0, %v428
    %v430 = vpop.f32.mrb[0].mxu0
    %431 = vmatprep.mubr.bf16.mxu0 0
    %432 = vmatmul.mubr.bf16.gmra.mrb[0].mxu0 %v313
    %v433 = vpop.f32.mrb[0].mxu0
    %v434 = vadd.f32 0.0, %v433
    %v435 = vpop.f32.mrb[0].mxu0
    %v436 = vpop.f32.mrb[0].mxu0
    %v437 = vadd.f32 0.0, %v436
    %v438 = vpop.f32.mrb[0].mxu0
    %439 = vmatprep.mubr.bf16.mxu0 0
    %440 = vmatmul.mubr.bf16.gmra.mrb[0].mxu0 %v314
    %v441 = vpop.f32.mrb[0].mxu0
    %v442 = vadd.f32 0.0, %v441
    %v443 = vpop.f32.mrb[0].mxu0
    %v444 = vpop.f32.mrb[0].mxu0
    %v445 = vadd.f32 0.0, %v444
    %v446 = vpop.f32.mrb[0].mxu0
    %447 = vmatprep.mubr.bf16.mxu0 0
    %448 = vmatmul.mubr.bf16.gmra.mrb[0].mxu0 %v315
    %v449 = vpop.f32.mrb[0].mxu0
    %v450 = vadd.f32 0.0, %v449
    %v451 = vpop.f32.mrb[0].mxu0
    %v452 = vpop.f32.mrb[0].mxu0
    %v453 = vadd.f32 0.0, %v452
    %v454 = vpop.f32.mrb[0].mxu0
    %455 = vmatprep.mubr.bf16.mxu0 0
    %456 = vmatmul.mubr.bf16.gmra.mrb[0].mxu0 %v316
    %v457 = vpop.f32.mrb[0].mxu0
    %v458 = vadd.f32 0.0, %v457
    %v459 = vpop.f32.mrb[0].mxu0
    %v460 = vpop.f32.mrb[0].mxu0
    %v461 = vadd.f32 0.0, %v460
    %v462 = vpop.f32.mrb[0].mxu0
    %463 = vmatprep.mubr.bf16.mxu0 0
    %464 = vmatmul.mubr.bf16.gmra.mrb[0].mxu0 %v317
    %v465 = vpop.f32.mrb[0].mxu0
    %v466 = vadd.f32 0.0, %v465
    %v467 = vpop.f32.mrb[0].mxu0
    %v468 = vpop.f32.mrb[0].mxu0
    %v469 = vadd.f32 0.0, %v468
    %v470 = vpop.f32.mrb[0].mxu0
    %471 = vmatprep.mubr.bf16.mxu0 0
    %472 = vmatmul.mubr.bf16.gmra.mrb[0].mxu0 %v318
    %v473 = vpop.f32.mrb[0].mxu0
    %v474 = vadd.f32 0.0, %v473
    %v475 = vpop.f32.mrb[0].mxu0
    %v476 = vpop.f32.mrb[0].mxu0
    %v477 = vadd.f32 0.0, %v476
    %v478 = vpop.f32.mrb[0].mxu0
    %479 = vdwg.mxu0
    %v480 = vpack.c.bf16 %v421, %v418
    %v481 = vpack.c.bf16 %v429, %v426
    %v482 = vpack.c.bf16 %v437, %v434
    %v483 = vpack.c.bf16 %v445, %v442
    %v484 = vpack.c.bf16 %v453, %v450
    %v485 = vpack.c.bf16 %v461, %v458
    %v486 = vpack.c.bf16 %v469, %v466
    %v487 = vpack.c.bf16 %v477, %v474
    %v488 = vld [vmem:[%s4] sm:$0x1]
    %v490 = vlaneseq
    %v491 = vshrl.u32 %v490, 7
    %v492 = vsub.s32 0, %v491
    %v493 = vrot.slane %v488, %v492
    %495 = vmatprep.subr.bf16.mxu0 0
    %496 = vmatpush1.bf16.msra.mxu0 %v480
    %497 = vmatprep.subr.bf16.mxu0 0
    %498 = vmatpush1.bf16.msra.mxu0 %v481
    %499 = vmatprep.subr.bf16.mxu0 0
    %500 = vmatpush1.bf16.msra.mxu0 %v482
    %501 = vmatprep.subr.bf16.mxu0 0
    %502 = vmatpush1.bf16.msra.mxu0 %v483
    %503 = vmatprep.subr.bf16.mxu0 0
    %504 = vmatpush1.bf16.msra.mxu0 %v484
    %505 = vmatprep.subr.bf16.mxu0 0
    %506 = vmatpush1.bf16.msra.mxu0 %v485
    %507 = vmatprep.subr.bf16.mxu0 0
    %508 = vmatpush1.bf16.msra.mxu0 %v486
    %509 = vmatprep.subr.bf16.mxu0 0
    %510 = vmatpush1.bf16.msra.mxu0 %v487
    %511 = vmatprep.subr.bf16.mxu0 0
    %512 = vmatpush1.bf16.msra.mxu0 0
    %513 = vmatprep.subr.bf16.mxu0 0
    %514 = vmatpush1.bf16.msra.mxu0 0
    %515 = vmatprep.subr.bf16.mxu0 0
    %516 = vmatpush1.bf16.msra.mxu0 0
    %517 = vmatprep.subr.bf16.mxu0 0
    %518 = vmatpush1.bf16.msra.mxu0 0
    %519 = vmatprep.subr.bf16.mxu0 0
    %520 = vmatpush1.bf16.msra.mxu0 0
    %521 = vmatprep.subr.bf16.mxu0 0
    %522 = vmatpush1.bf16.msra.mxu0 0
    %523 = vmatprep.subr.bf16.mxu0 0
    %524 = vmatpush1.bf16.msra.mxu0 0
    %525 = vmatprep.subr.bf16.mxu0 0
    %526 = vmatpush1.bf16.msra.mxu0 0
    %527 = vmatprep.mubr.bf16.mxu0 0
    %528 = vmatmul.mubr.bf16.gmra.mrb[0].mxu0 %v134
    %v529 = vpop.f32.mrb[0].mxu0
    %v530 = vadd.f32 %v493, %v529
    %v531 = vpop.f32.mrb[0].mxu0
    %v532 = vpop.f32.mrb[0].mxu0
    %v533 = vadd.f32 %v493, %v532
    %v534 = vpop.f32.mrb[0].mxu0
    %535 = vmatprep.mubr.bf16.mxu0 0
    %536 = vmatmul.mubr.bf16.gmra.mrb[0].mxu0 %v135
    %v537 = vpop.f32.mrb[0].mxu0
    %v538 = vadd.f32 %v493, %v537
    %v539 = vpop.f32.mrb[0].mxu0
    %v540 = vpop.f32.mrb[0].mxu0
    %v541 = vadd.f32 %v493, %v540
    %v542 = vpop.f32.mrb[0].mxu0
    %543 = vmatprep.mubr.bf16.mxu0 0
    %544 = vmatmul.mubr.bf16.gmra.mrb[0].mxu0 %v136
    %v545 = vpop.f32.mrb[0].mxu0
    %v546 = vadd.f32 %v493, %v545
    %v547 = vpop.f32.mrb[0].mxu0
    %v548 = vpop.f32.mrb[0].mxu0
    %v549 = vadd.f32 %v493, %v548
    %v550 = vpop.f32.mrb[0].mxu0
    %551 = vmatprep.mubr.bf16.mxu0 0
    %552 = vmatmul.mubr.bf16.gmra.mrb[0].mxu0 %v137
    %v553 = vpop.f32.mrb[0].mxu0
    %v554 = vadd.f32 %v493, %v553
    %v555 = vpop.f32.mrb[0].mxu0
    %v556 = vpop.f32.mrb[0].mxu0
    %v557 = vadd.f32 %v493, %v556
    %v558 = vpop.f32.mrb[0].mxu0
    %559 = vmatprep.mubr.bf16.mxu0 0
    %560 = vmatmul.mubr.bf16.gmra.mrb[0].mxu0 %v138
    %v561 = vpop.f32.mrb[0].mxu0
    %v562 = vadd.f32 %v493, %v561
    %v563 = vpop.f32.mrb[0].mxu0
    %v564 = vpop.f32.mrb[0].mxu0
    %v565 = vadd.f32 %v493, %v564
    %v566 = vpop.f32.mrb[0].mxu0
    %567 = vmatprep.mubr.bf16.mxu0 0
    %568 = vmatmul.mubr.bf16.gmra.mrb[0].mxu0 %v139
    %v569 = vpop.f32.mrb[0].mxu0
    %v570 = vadd.f32 %v493, %v569
    %v571 = vpop.f32.mrb[0].mxu0
    %v572 = vpop.f32.mrb[0].mxu0
    %v573 = vadd.f32 %v493, %v572
    %v574 = vpop.f32.mrb[0].mxu0
    %575 = vmatprep.mubr.bf16.mxu0 0
    %576 = vmatmul.mubr.bf16.gmra.mrb[0].mxu0 %v140
    %v577 = vpop.f32.mrb[0].mxu0
    %v578 = vadd.f32 %v493, %v577
    %v579 = vpop.f32.mrb[0].mxu0
    %v580 = vpop.f32.mrb[0].mxu0
    %v581 = vadd.f32 %v493, %v580
    %v582 = vpop.f32.mrb[0].mxu0
    %583 = vmatprep.mubr.bf16.mxu0 0
    %584 = vmatmul.mubr.bf16.gmra.mrb[0].mxu0 %v141
    %v585 = vpop.f32.mrb[0].mxu0
    %v586 = vadd.f32 %v493, %v585
    %v587 = vpop.f32.mrb[0].mxu0
    %v588 = vpop.f32.mrb[0].mxu0
    %v589 = vadd.f32 %v493, %v588
    %v590 = vpop.f32.mrb[0].mxu0
    %591 = vdwg.mxu0
    %592 = vst [vmem:[#allocation8] sm:$0xff] %v530
    %593 = vst [vmem:[#allocation8 + $0x8] sm:$0xff] %v533
    %594 = vst [vmem:[#allocation8 + $0x10] sm:$0xff] %v538
    %595 = vst [vmem:[#allocation8 + $0x18] sm:$0xff] %v541
    %596 = vst [vmem:[#allocation8 + $0x20] sm:$0xff] %v546
    %597 = vst [vmem:[#allocation8 + $0x28] sm:$0xff] %v549
    %598 = vst [vmem:[#allocation8 + $0x30] sm:$0xff] %v554
    %599 = vst [vmem:[#allocation8 + $0x38] sm:$0xff] %v557
    %600 = vst [vmem:[#allocation8 + $0x40] sm:$0xff] %v562
    %601 = vst [vmem:[#allocation8 + $0x48] sm:$0xff] %v565
    %602 = vst [vmem:[#allocation8 + $0x50] sm:$0xff] %v570
    %603 = vst [vmem:[#allocation8 + $0x58] sm:$0xff] %v573
    %604 = vst [vmem:[#allocation8 + $0x60] sm:$0xff] %v578
    %605 = vst [vmem:[#allocation8 + $0x68] sm:$0xff] %v581
    %606 = vst [vmem:[#allocation8 + $0x70] sm:$0xff] %v586
    %607 = vst [vmem:[#allocation8 + $0x78] sm:$0xff] %v589
    // Predicated region
    $region34: #{tpu_custom_call.1} parent=1 // pred_check
      _
    $region35: #{tpu_custom_call.1} parent=1 // pred_check_branch
      %609 = sbr.rel (0) target = $region37
    $region36: #{tpu_custom_call.1} parent=1 // pred_region
      %s611 = ssub.s32 2048, 2048
      %612 = vsyncadd [#allocation4], %s611
      %s613 = sshll.u32 [#allocation8], 4
      %s614 = int_to_ptr.vmem [resolvable:$true] %s613
      %619 = dma.vmem_to_hbm [thread:$0]  %s614, 2048, %s5, [#allocation4], 128, 128, 8
    $region37: #{tpu_custom_call.1} parent=1 // pred_fallthru
      _
    // Predicated region
    $region38: #{tpu_custom_call.1} parent=1 // pred_check
      _
    $region39: #{tpu_custom_call.1} parent=1 // pred_check_branch
      %621 = sbr.rel (0) target = $region41
    $region40: #{tpu_custom_call.1} parent=1 // pred_region
      %622 = dma.done [#allocation4], 2048
    $region41: #{tpu_custom_call.1} parent=1 // pred_fallthru
      _
    %623 = vsyncpa [#allocation3], 1
    %624 = vsyncpa [#allocation6], 1
    %625 = vsyncpa [#allocation4], 1

</llo_original>
